<compile_context>
chip_gen: v7x
topology: tpu7x:2x2x1
jax: 0.10.0
libtpu: 0.0.40
codegen_flags: <defaults>
</compile_context>

<pallas_src>
import functools

import jax
import jax.numpy as jnp
from jax.experimental import pallas as pl
from jax.experimental.pallas import tpu as pltpu

IN_FEATURES = 10
OUT_FEATURES = 1

# Largest lane-dense batch tile.  VMEM cost per grid step:
#   input  (10 -> 16 sublanes, tile_b lanes) f32, double-buffered : 2 * 16 * tile_b * 4
#   output ( 1 ->  8 sublanes, tile_b lanes) f32, double-buffered : 2 *  8 * tile_b * 4
#   => ~192 B per lane -> ~12.6 MiB at 65536: safely under the 32 MiB scoped VMEM
#      default on v7x (64 MiB physical).  On v5e/v6e (128 MiB physical) 131072 with
#      vmem_limit_bytes=64 MiB is also fine; we keep the conservative cross-chip cap.
MAX_TILE_B = 65536

# Below this, pallas launch + per-step overhead dwarfs the ~160 FLOP/row of work;
# XLA's fused gemv is strictly faster.
PALLAS_MIN_BATCH = 4096


def _linear_fm_kernel(xt_ref, w_ref, b_ref, ot_ref):
    """One batch tile of y_t(1, TILE_B) = sum_IN( w(IN,1) * x_t(IN, TILE_B) ) + b.

    xt_ref: (IN, TILE_B) VMEM  -- lane-dense along batch (f32 or bf16 storage)
    w_ref : (IN, 1)      VMEM  -- weight column; constant block index => re-fetch skipped
    b_ref : (1,)         SMEM  -- scalar bias
    ot_ref: (1, TILE_B)  VMEM  -- lane-dense output => unmasked vst
    """
    xt = xt_ref[...].astype(jnp.float32)           # f32 compute (v5e has no bf16 VPU)
    w = w_ref[...]                                 # (IN, 1) f32
    # VPU elementwise multiply + XLU sublane reduction; MXU intentionally idle
    # (an N=1, K=10 matmul wastes the systolic array and pays result-drain latency).
    acc = jnp.sum(xt * w, axis=0, keepdims=True)   # (1, TILE_B) f32
    ot_ref[...] = (acc + b_ref[0]).astype(ot_ref.dtype)


def prepare_params(weight, bias):
    """Hoisted out of the hot path (run once at parameter-load time).

    weight: (OUT, IN) PyTorch layout -> (IN, OUT) column; bias -> (1,) for SMEM."""
    assert weight.shape == (OUT_FEATURES, IN_FEATURES)
    w_col = jnp.asarray(weight, jnp.float32).T                       # (IN, 1)
    b_vec = jnp.asarray(bias, jnp.float32).reshape((OUT_FEATURES,))  # (1,)
    return w_col, b_vec


def _pick_tile_b(batch):
    """Bounded, lane-dense batch tile: multiple of 128, capped at MAX_TILE_B."""
    if batch >= MAX_TILE_B:
        return MAX_TILE_B
    return max(128, ((batch + 127) // 128) * 128)


@functools.partial(jax.jit, static_argnames=("tile_b",))
def pallas_linear_fm(x_t, w_col, b_vec, *, tile_b=None):
    """Pallas forward on feature-major activations.

    x_t: (10, B) f32 or bf16; w_col: (10, 1) f32; b_vec: (1,) f32  ->  (B, 1) f32.
    """
    in_f, batch = x_t.shape
    assert in_f == IN_FEATURES
    if tile_b is None:
        tile_b = _pick_tile_b(batch)
    # Ragged tail (batch % tile_b != 0) is handled by Pallas edge masking: OOB reads
    # only feed output lanes whose stores are dropped.  No giant-block fallback.
    grid = (pl.cdiv(batch, tile_b),)

    out_t = pl.pallas_call(
        _linear_fm_kernel,
        out_shape=jax.ShapeDtypeStruct((OUT_FEATURES, batch), jnp.float32),
        grid_spec=pltpu.PrefetchScalarGridSpec(
            num_scalar_prefetch=0,
            grid=grid,
            in_specs=[
                pl.BlockSpec((IN_FEATURES, tile_b), lambda i: (0, i)),
                pl.BlockSpec((IN_FEATURES, OUT_FEATURES), lambda i: (0, 0)),
                pl.BlockSpec(memory_space=pltpu.MemorySpace.SMEM),   # scalar bias
            ],
            out_specs=pl.BlockSpec((OUT_FEATURES, tile_b), lambda i: (0, i)),
        ),
        compiler_params=pltpu.CompilerParams(
            # Batch tiles are independent -> shard across v7x's 2 TensorCores
            # (neutral on single-TC v5e/v6e).
            # TODO(synk): on v7x verify TC sharding engages; if not, switch to
            # pltpu.CORE_PARALLEL / an explicit core_map with a leading size-2 axis.
            dimension_semantics=("parallel",),
            vmem_limit_bytes=32 * 1024 * 1024,   # explicit; safe on v5e/v6e/v7x
        ),
    )(x_t, w_col, b_vec)

    # (1, B) -> (B, 1): same flat order => metadata-only reshape (not a transpose).
    return out_t.reshape(batch, OUT_FEATURES)


def linear_forward_fm(x_t, w_col, b_vec):
    """Feature-major entry point: Pallas for large B, fused XLA for small B."""
    batch = x_t.shape[1]
    if batch < PALLAS_MIN_BATCH:
        # Tiny problem: one fused XLA op beats any kernel launch; no transpose:
        # (10,) @ (10, B) -> (B,)
        return (w_col[:, 0] @ x_t).reshape(batch, OUT_FEATURES) + b_vec
    return pallas_linear_fm(x_t, w_col, b_vec)


@jax.jit
def linear_forward(x, w_col, b_vec):
    """Module-faithful forward: x (B, 10) batch-major -> (B, 1), like nn.Linear(10, 1).

    For batch-major activations XLA's fused gemv is the right tool at this size and
    avoids ever materializing x.T (per perf review).
    """
    # TODO(synk): for a large-B Pallas path, the producer should emit activations
    # feature-major (10, B) and call linear_forward_fm / pallas_linear_fm directly.
    return x @ w_col + b_vec


if __name__ == "__main__":
    key = jax.random.PRNGKey(0)
    kw, kb, kx1, kx2, kx3 = jax.random.split(key, 5)

    # Deterministic params (uniform in nn.Linear's default init range).
    bound = 1.0 / jnp.sqrt(IN_FEATURES)
    weight = jax.random.uniform(kw, (OUT_FEATURES, IN_FEATURES), jnp.float32, -bound, bound)
    bias = jax.random.uniform(kb, (OUT_FEATURES,), jnp.float32, -bound, bound)
    w_col, b_vec = prepare_params(weight, bias)          # once, outside the hot path

    # 1) Pallas kernel on feature-major activations, small batch (single 256-lane tile).
    B1 = 256
    xt1 = jax.random.normal(kx1, (IN_FEATURES, B1), jnp.float32)
    y1 = pallas_linear_fm(xt1, w_col, b_vec)
    jax.block_until_ready(y1)
    ref1 = xt1.T @ weight.T + bias
    assert y1.shape == (B1, OUT_FEATURES)
    assert jnp.allclose(y1, ref1, atol=1e-5), "mismatch vs reference (B=256)"

    # 2) Multi-step grid + ragged tail (B=300 not a multiple of 128), small tile override.
    B2 = 300
    xt2 = jax.random.normal(kx2, (IN_FEATURES, B2), jnp.float32)
    y2 = pallas_linear_fm(xt2, w_col, b_vec, tile_b=128)   # grid = 3, masked short tail
    jax.block_until_ready(y2)
    ref2 = xt2.T @ weight.T + bias
    assert jnp.allclose(y2, ref2, atol=1e-5), "mismatch vs reference (B=300, ragged tail)"

    # 3) bf16-stored activations, f32 compute inside the kernel (halves HBM read traffic).
    y3 = pallas_linear_fm(xt1.astype(jnp.bfloat16), w_col, b_vec)
    jax.block_until_ready(y3)
    assert jnp.allclose(y3, ref1, atol=5e-2), "mismatch vs reference (bf16 storage)"

    # 4) Module-faithful batch-major API (XLA fast path — no transpose, no kernel launch).
    B4 = 8
    x4 = jax.random.normal(kx3, (B4, IN_FEATURES), jnp.float32)
    y4 = linear_forward(x4, w_col, b_vec)
    jax.block_until_ready(y4)
    assert jnp.allclose(y4, x4 @ weight.T + bias, atol=1e-5), "mismatch vs reference (B=8)"

    # 5) Feature-major dispatcher (small B -> fused XLA path, still no transpose).
    y5 = linear_forward_fm(xt1, w_col, b_vec)
    jax.block_until_ready(y5)
    assert jnp.allclose(y5, ref1, atol=1e-5), "mismatch vs reference (dispatcher)"

    print("KERNEL_OK")
</pallas_src>

<mosaic_0001>
module attributes {stable_mosaic.version = 11 : i64} {
  func.func @_linear_fm_kernel(%arg0: i32, %arg1: memref<10x256xf32, #tpu.memory_space<vmem>>, %arg2: memref<10x1xf32, #tpu.memory_space<vmem>>, %arg3: memref<1xf32, #tpu.memory_space<smem>>, %arg4: memref<1x256xf32, #tpu.memory_space<vmem>>) attributes {dimension_semantics = [#tpu.dimension_semantics<parallel>], iteration_bounds = array<i64: 1>, scalar_prefetch = 0 : i64, scratch_operands = 0 : i64, tpu.core_type = #tpu.core_type<tc>, window_params = [{transform_indices = @transform_0, window_bounds = array<i64: 10, 256>}, {pipeline_mode = #tpu.pipeline_mode<synchronous>, transform_indices = @transform_1, window_bounds = array<i64: 10, 1>}, {transform_indices = @transform_2, window_bounds = array<i64: 1>}, {transform_indices = @transform_3, window_bounds = array<i64: 1, 256>}]} {
    %c0 = arith.constant 0 : index
    %c0_0 = arith.constant 0 : index
    %0 = vector.load %arg1[%c0, %c0_0] : memref<10x256xf32, #tpu.memory_space<vmem>>, vector<10x256xf32>
    %c0_1 = arith.constant 0 : index
    %c0_2 = arith.constant 0 : index
    %1 = vector.load %arg2[%c0_1, %c0_2] : memref<10x1xf32, #tpu.memory_space<vmem>>, vector<10x1xf32>
    %2 = vector.broadcast %1 : vector<10x1xf32> to vector<10x256xf32>
    %3 = arith.mulf %0, %2 : vector<10x256xf32>
    %cst = arith.constant dense<0.000000e+00> : vector<256xf32>
    %4 = vector.multi_reduction <add>, %3, %cst [0] : vector<10x256xf32> to vector<256xf32>
    %5 = vector.shape_cast %4 : vector<256xf32> to vector<1x256xf32>
    %c0_3 = arith.constant 0 : index
    %6 = memref.load %arg3[%c0_3] : memref<1xf32, #tpu.memory_space<smem>>
    %7 = vector.broadcast %6 : f32 to vector<1x256xf32>
    %8 = arith.addf %5, %7 : vector<1x256xf32>
    %c0_4 = arith.constant 0 : index
    %c0_5 = arith.constant 0 : index
    %9 = vector.load %arg4[%c0_4, %c0_5] : memref<1x256xf32, #tpu.memory_space<vmem>>, vector<1x256xf32>
    tpu.vector_store %arg4[%c0_4, %c0_5], %8 {strides = array<i32>} : memref<1x256xf32, #tpu.memory_space<vmem>>, vector<1x256xf32>,
    return
  }
  func.func @transform_0(%arg0: i32) -> (i32, i32) {
    %c0_i32 = arith.constant 0 : i32
    %c0_i32_0 = arith.constant 0 : i32
    return %c0_i32, %arg0 : i32, i32
  }
  func.func @transform_1(%arg0: i32) -> (i32, i32) {
    %c0_i32 = arith.constant 0 : i32
    %c0_i32_0 = arith.constant 0 : i32
    %c0_i32_1 = arith.constant 0 : i32
    return %c0_i32, %c0_i32_0 : i32, i32
  }
  func.func @transform_2(%arg0: i32) -> i32 {
    %c0_i32 = arith.constant 0 : i32
    %c0_i32_0 = arith.constant 0 : i32
    return %c0_i32 : i32
  }
  func.func @transform_3(%arg0: i32) -> (i32, i32) {
    %c0_i32 = arith.constant 0 : i32
    %c0_i32_0 = arith.constant 0 : i32
    return %c0_i32, %arg0 : i32, i32
  }
}

</mosaic_0001>

<llo_original>
// kernel: pallas_linear_fm.1
$region0: #{pallas_linear_fm.1}
  #allocation0 [shape = 'u32[]', space=smem, size = 0x4, offset = 0x4, fixed_abs, tag = 'smem constant byte address 0x4 - core index']
  #allocation1 [shape = 'u32[144,128]{1,0:T(1,128)}', space=vmem, size = 0x12000, scoped, tag = 'internal scratch']
  #allocation2 [shape = 'f32[1]{0:T(128)S(6)}', space=smem, size = 0x200, scoped, tag = 'scoped memory for pallas_linear_fm.1']
  %s0 = inlined_call_operand.hbm [shape: f32[10,256], index: 0, kind: input, shape index: {}]
  %s1 = inlined_call_operand.vmem [shape: f32[10,1], index: 1, kind: input, shape index: {}]
  %s2 = inlined_call_operand.<no memory space> [shape: f32[1], index: 2, kind: input, shape index: {}]
  %s3 = inlined_call_operand.hbm [shape: f32[1,256], index: 3, kind: output, shape index: {}]
  %s4 = sld [smem:[#allocation0]]
  $region26: #{pallas_linear_fm.1} parent=0
    _
  %s6 = ssub.s32 1, %s4
  %s7 = scalar_select 0, %s6, %s4
  %8 = sst [smem:[#allocation2]] %s2
  $region1: #{pallas_linear_fm.1} parent=0
    #allocation3 [shape = 'u8[16384]{0}', space=vmem, size = 0x4000, scoped, tag = 'input window, operand 0, single buffered']
    #allocation4 [shape = 's32[1]{0}', space=sflag, size = 0x4, scoped, tag = 'scoped memory for pallas_linear_fm.1']
    #allocation5 [shape = 's32[1]{0}', space=sflag, size = 0x4, scoped, tag = 'scoped memory for pallas_linear_fm.1']
    #allocation6 [shape = 'u8[1024]{0}', space=vmem, size = 0x400, scoped, tag = 'output window, operand 0, single buffered']
    %9 = vsyncpa [#allocation4], 0
    %10 = vsyncpa [#allocation5], 0
    // Predicated region
    $region2: #{pallas_linear_fm.1} parent=1 // pred_check
      _
    $region3: #{pallas_linear_fm.1} parent=1 // pred_check_branch
      %12 = sbr.rel (0) target = $region5
    $region4: #{pallas_linear_fm.1} parent=1 // pred_region
      %s14 = ssub.s32 512, 512
      %15 = vsyncadd [#allocation4], %s14
      %s16 = sshll.u32 [#allocation3], 4
      %s17 = int_to_ptr.vmem [resolvable:$true] %s16
      %22 = dma.hbm_to_vmem [thread:$0]  %s0, 512, %s17, [#allocation4], 256, 256, 16
    $region5: #{pallas_linear_fm.1} parent=1 // pred_fallthru
      _
    // Predicated region
    $region6: #{pallas_linear_fm.1} parent=1 // pred_check
      _
    $region7: #{pallas_linear_fm.1} parent=1 // pred_check_branch
      %24 = sbr.rel (0) target = $region9
    $region8: #{pallas_linear_fm.1} parent=1 // pred_region
      _
    $region9: #{pallas_linear_fm.1} parent=1 // pred_fallthru
      _
    // Predicated region
    $region10: #{pallas_linear_fm.1} parent=1 // pred_check
      _
    $region11: #{pallas_linear_fm.1} parent=1 // pred_check_branch
      %26 = sbr.rel (0) target = $region13
    $region12: #{pallas_linear_fm.1} parent=1 // pred_region
      _
    $region13: #{pallas_linear_fm.1} parent=1 // pred_fallthru
      _
    // Predicated region
    $region14: #{pallas_linear_fm.1} parent=1 // pred_check
      _
    $region15: #{pallas_linear_fm.1} parent=1 // pred_check_branch
      %28 = sbr.rel (0) target = $region17
    $region16: #{pallas_linear_fm.1} parent=1 // pred_region
      %29 = dma.done [#allocation4], 512
    $region17: #{pallas_linear_fm.1} parent=1 // pred_fallthru
      _
    %v30 = vld [vmem:[#allocation3] sm:$0xff]
    %v31 = vld [vmem:[#allocation3 + $0x8] sm:$0xff]
    %v32 = vld [vmem:[#allocation3 + $0x10] sm:$0x3]
    %v33 = vld [vmem:[#allocation3 + $0x18] sm:$0x3]
    %v34 = vld [vmem:[%s1] sm:$0xff]
    %v35 = vld [vmem:[%s1 + $0x8] sm:$0x3]
    %37 = vset.pattern.permute.xlu0 0
    %38 = vperm.xlu0 %37, %v34
    %v39 = vpop.permute.xlu0 %38
    %42 = vset.pattern.permute.xlu0 0
    %43 = vperm.xlu0 %42, %v35
    %v44 = vpop.permute.xlu0 %43
    %v46 = vmul.f32 %v30, %v39
    %v47 = vmul.f32 %v31, %v39
    %v48 = vmul.f32 %v32, %v44
    %v49 = vmul.f32 %v33, %v44
    %vm50 = vcmask 1041408
    %v51 = vsel %vm50, %v48, 0.0
    %v52 = vadd.f32 %v46, %v51
    %v53 = vrot.slane %v52, 4
    %v54 = vadd.f32 %v52, %v53
    %v55 = vrot.slane %v54, 2
    %v56 = vadd.f32 %v54, %v55
    %v57 = vrot.slane %v56, 1
    %v58 = vadd.f32 %v56, %v57
    %v59 = vsel %vm50, %v49, 0.0
    %v60 = vadd.f32 %v47, %v59
    %v61 = vrot.slane %v60, 4
    %v62 = vadd.f32 %v60, %v61
    %v63 = vrot.slane %v62, 2
    %v64 = vadd.f32 %v62, %v63
    %v65 = vrot.slane %v64, 1
    %v66 = vadd.f32 %v64, %v65
    %s67 = sld [smem:[#allocation2]]
    %v68 = vstv %s67
    %v69 = vadd.f32 %v58, %v68
    %v70 = vadd.f32 %v66, %v68
    %v73 = vcombine.low %v69, %v70
    %v75 = vunpack.c.l.s4 1966171168
    %v76 = vunpack.c.0.s8 %v75
    %v77 = vlaneseq
    %v78 = vshrl.u32 %v77, 7
    %v79 = vsub.s32 %v76, %v78
    %v80 = vrot.slane %v73, %v79
    %v82 = vunpack.c.l.s4 1966171168
    %v83 = vunpack.c.0.s8 %v82
    %v84 = vlaneseq
    %v85 = vshrl.u32 %v84, 7
    %v86 = vsub.s32 %v83, %v85
    %v87 = vrot.slane %v80, %v86
    %v89 = vlaneseq
    %vm90 = vcmp.ge.s32.totalorder %v89, 0
    %vm91 = vcmp.lt.s32.totalorder %v89, 256
    %vm92 = vmand %vm90, %vm91
    %93 = vst.msk [vmem:[#allocation6] sm:$0x3] %vm92, %v87
    // Predicated region
    $region18: #{pallas_linear_fm.1} parent=1 // pred_check
      _
    $region19: #{pallas_linear_fm.1} parent=1 // pred_check_branch
      %95 = sbr.rel (0) target = $region21
    $region20: #{pallas_linear_fm.1} parent=1 // pred_region
      %s97 = ssub.s32 32, 32
      %98 = vsyncadd [#allocation5], %s97
      %s100 = sshll.u32 [#allocation6], 4
      %s101 = int_to_ptr.vmem [resolvable:$true] %s100
      %103 = dma.vmem_to_hbm [thread:$0]  %s101, 32, %s3, [#allocation5]
    $region21: #{pallas_linear_fm.1} parent=1 // pred_fallthru
      _
    // Predicated region
    $region22: #{pallas_linear_fm.1} parent=1 // pred_check
      _
    $region23: #{pallas_linear_fm.1} parent=1 // pred_check_branch
      %105 = sbr.rel (0) target = $region25
    $region24: #{pallas_linear_fm.1} parent=1 // pred_region
      %106 = dma.done [#allocation5], 32
    $region25: #{pallas_linear_fm.1} parent=1 // pred_fallthru
      _
    %107 = vsyncpa [#allocation4], 1
    %108 = vsyncpa [#allocation5], 1

</llo_original>
